<compile_context>
chip_gen: v6e
topology: v6e:2x2x1
jax: 0.10.0
libtpu: 0.0.40
codegen_flags: <defaults>
</compile_context>

<pallas_src>
import functools

import jax
import jax.numpy as jnp
from jax.experimental import pallas as pl
from jax.experimental.pallas import tpu as pltpu

LN_EPS = 1e-12                  # HF BERT LayerNorm eps
# Toy working set << 1 MiB, so this limit is irrelevant here; at BERT-base
# scale re-derive per generation (cap ~48 MiB on v7x's 64 MiB VMEM, relax
# toward 64-100 MiB on v5e/v6e's 128 MiB).
_VMEM_LIMIT = 32 * 1024 * 1024

VMEM = pl.BlockSpec(memory_space=pltpu.MemorySpace.VMEM)


def _bf16(x):
    return x.astype(jnp.bfloat16)


def _layernorm(x, gamma, beta, eps=LN_EPS):
    mu = jnp.mean(x, axis=-1, keepdims=True)
    var = jnp.mean(jnp.square(x - mu), axis=-1, keepdims=True)
    inv = jax.lax.rsqrt(var + eps)
    return (x - mu) * inv * gamma + beta


def _cparams(sem=None):
    return pltpu.CompilerParams(dimension_semantics=sem,
                                vmem_limit_bytes=_VMEM_LIMIT)


# ----------------------------- Pallas kernels ------------------------------

def _image_stem_kernel(patch_ref, cw_ref, cb_ref, pool_ref, pw_ref, pb_ref,
                       o_ref):
    """Single program: conv (im2col matmul) + ReLU + avg-pool matmul + proj."""
    B = patch_ref.shape[0]
    for b in range(B):                                  # static unroll, tiny B
        feat = jnp.dot(_bf16(patch_ref[b]), cw_ref[...],
                       preferred_element_type=jnp.float32) + cb_ref[...]
        feat = jnp.maximum(feat, 0.0)                   # (P, C) f32
        pooled = jnp.dot(pool_ref[...], _bf16(feat),
                         preferred_element_type=jnp.float32)     # (n_img, C)
        o_ref[b] = jnp.dot(_bf16(pooled), pw_ref[...],
                           preferred_element_type=jnp.float32) + pb_ref[...]


def image_stem(patches, conv_w, conv_b, pool_mat, proj_w, proj_b):
    B = patches.shape[0]
    n_img = pool_mat.shape[0]
    H = proj_w.shape[1]
    return pl.pallas_call(
        _image_stem_kernel,
        out_shape=jax.ShapeDtypeStruct((B, n_img, H), jnp.float32),
        in_specs=[VMEM] * 6,
        out_specs=VMEM,
        compiler_params=_cparams(),
    )(patches, conv_w, conv_b, pool_mat, proj_w, proj_b)


def _embed_ln_kernel(tok_ref, pos_ref, typ_ref, g_ref, b_ref, o_ref):
    """(token + position + type) + LayerNorm for the whole (B, S, H) slab."""
    x = tok_ref[...] + pos_ref[...] + typ_ref[...]
    o_ref[...] = _layernorm(x, g_ref[...], b_ref[...])


def embed_layernorm(tok, pos, typ, gamma, beta):
    B, S, H = tok.shape
    return pl.pallas_call(
        _embed_ln_kernel,
        out_shape=jax.ShapeDtypeStruct((B, S, H), jnp.float32),
        in_specs=[VMEM] * 5,
        out_specs=VMEM,
        compiler_params=_cparams(),
    )(tok, pos, typ, gamma.reshape(1, H), beta.reshape(1, H))


def _encoder_stack_kernel(x_ref, m_ref, wqkv_ref, bqkv_ref, wo_ref, bo_ref,
                          g1_ref, b1_ref, wi_ref, bi_ref, wo2_ref, bo2_ref,
                          g2_ref, b2_ref, o_ref, xs_ref, *, n_heads, scale):
    """All encoder layers; one grid step per layer, activation resident in VMEM."""
    layer = pl.program_id(0)

    @pl.when(layer == 0)
    def _():
        xs_ref[...] = x_ref[...]          # activation carried across layers

    B, S, H = xs_ref.shape
    hd = H // n_heads

    wqkv = wqkv_ref[0]                    # (nh, H, 3*hd)  bf16, head-major
    bqkv = bqkv_ref[0]                    # (nh, 1, 3*hd)  f32
    wo = wo_ref[0]                        # (nh, hd, H)    bf16, head-major
    bo = bo_ref[0]                        # (1, H)
    wi = wi_ref[0]                        # (H, I) bf16
    bi = bi_ref[0]                        # (1, I)
    wo2 = wo2_ref[0]                      # (I, H) bf16
    bo2 = bo2_ref[0]                      # (1, H)
    g1, b1 = g1_ref[0], b1_ref[0]
    g2, b2 = g2_ref[0], b2_ref[0]

    for b in range(B):                    # static unroll; at scale -> grid axis
        x = xs_ref[b]                     # (S, H) f32
        m = m_ref[b]                      # (1, S) additive mask (single broadcast)

        # ---- attention: head-batched QKV / scores / context ----
        xh = jnp.broadcast_to(_bf16(x)[None], (n_heads, S, H))
        qkv = jnp.einsum("nsh,nhd->nsd", xh, wqkv,
                         preferred_element_type=jnp.float32) + bqkv
        q, k, v = qkv[..., :hd], qkv[..., hd:2 * hd], qkv[..., 2 * hd:]

        s = jnp.einsum("nqd,nkd->nqk", _bf16(q), _bf16(k),
                       preferred_element_type=jnp.float32) * scale + m
        s = s - jnp.max(s, axis=-1, keepdims=True)
        p = jnp.exp(s)
        p = p * pl.reciprocal(jnp.sum(p, axis=-1, keepdims=True), approx=True)
        ctx = jnp.einsum("nqk,nkd->nqd", _bf16(p), _bf16(v),
                         preferred_element_type=jnp.float32)      # (nh, S, hd)

        attn = jnp.sum(jnp.einsum("nsd,ndh->nsh", _bf16(ctx), wo,
                                  preferred_element_type=jnp.float32),
                       axis=0) + bo                               # (S, H)
        y1 = _layernorm(x + attn, g1, b1)

        # ---- FFN ----
        h1 = jnp.dot(_bf16(y1), wi, preferred_element_type=jnp.float32) + bi
        # TODO(synk): HF BERT uses erf-based gelu; tanh approximation used here.
        h1 = jax.nn.gelu(h1, approximate=True)
        ffn = jnp.dot(_bf16(h1), wo2, preferred_element_type=jnp.float32) + bo2
        xs_ref[b] = _layernorm(y1 + ffn, g2, b2)

    @pl.when(layer == pl.num_programs(0) - 1)
    def _():
        o_ref[...] = xs_ref[...]


def encoder_stack(x, mask, enc, *, n_heads):
    B, S, H = x.shape
    L = enc["w_qkv"].shape[0]
    hd = H // n_heads
    I = enc["wi"].shape[-1]
    scale = 1.0 / (hd ** 0.5)

    lmap3 = lambda l: (l, 0, 0)
    lmap4 = lambda l: (l, 0, 0, 0)

    grid_spec = pltpu.PrefetchScalarGridSpec(
        num_scalar_prefetch=0,
        grid=(L,),
        in_specs=[
            pl.BlockSpec((B, S, H), lambda l: (0, 0, 0)),        # embeddings
            pl.BlockSpec((B, 1, S), lambda l: (0, 0, 0)),        # additive mask
            pl.BlockSpec((1, n_heads, H, 3 * hd), lmap4),        # w_qkv (bf16)
            pl.BlockSpec((1, n_heads, 1, 3 * hd), lmap4),        # b_qkv
            pl.BlockSpec((1, n_heads, hd, H), lmap4),            # w_o (bf16)
            pl.BlockSpec((1, 1, H), lmap3),                      # b_o
            pl.BlockSpec((1, 1, H), lmap3),                      # ln1 gamma
            pl.BlockSpec((1, 1, H), lmap3),                      # ln1 beta
            pl.BlockSpec((1, H, I), lmap3),                      # wi (bf16)
            pl.BlockSpec((1, 1, I), lmap3),                      # bi
            pl.BlockSpec((1, I, H), lmap3),                      # wo2 (bf16)
            pl.BlockSpec((1, 1, H), lmap3),                      # bo2
            pl.BlockSpec((1, 1, H), lmap3),                      # ln2 gamma
            pl.BlockSpec((1, 1, H), lmap3),                      # ln2 beta
        ],
        out_specs=pl.BlockSpec((B, S, H), lambda l: (0, 0, 0)),
        scratch_shapes=[pltpu.VMEM((B, S, H), jnp.float32)],
    )
    return pl.pallas_call(
        functools.partial(_encoder_stack_kernel, n_heads=n_heads, scale=scale),
        out_shape=jax.ShapeDtypeStruct((B, S, H), jnp.float32),
        grid_spec=grid_spec,
        compiler_params=_cparams(("arbitrary",)),
    )(x, mask,
      enc["w_qkv"], enc["b_qkv"], enc["wo"], enc["bo"],
      enc["ln1_g"], enc["ln1_b"], enc["wi"], enc["bi"],
      enc["wo2"], enc["bo2"], enc["ln2_g"], enc["ln2_b"])


def _pooler_kernel(x_ref, w_ref, b_ref, o_ref):
    y = jnp.dot(_bf16(x_ref[...]), w_ref[...],
                preferred_element_type=jnp.float32) + b_ref[...]
    o_ref[...] = jnp.tanh(y)


def pooler(x, w, b):
    B = x.shape[0]
    return pl.pallas_call(
        _pooler_kernel,
        out_shape=jax.ShapeDtypeStruct((B, w.shape[1]), jnp.float32),
        in_specs=[VMEM, VMEM, VMEM],
        out_specs=VMEM,
        compiler_params=_cparams(),
    )(x, w, b)


# ------------------------------ configuration ------------------------------

class Cfg:
    batch = 2
    img_ch = 4          # stand-in for RGB channels
    img_hw = 16         # image spatial size
    img_hidden_sz = 16  # channels of the image trunk output (2048 in resnet152)
    num_image_embeds = 4        # -> adaptive pool to (2, 2)
    hidden_sz = 32
    n_heads = 4
    n_layers = 2
    intermediate_sz = 64
    vocab_size = 32
    max_position = 32
    type_vocab = 2
    cls_token_id = 1
    sep_token_id = 2
    txt_seq = 8


# ------------------------------ parameter init -----------------------------

def init_params(key, cfg):
    H, I = cfg.hidden_sz, cfg.intermediate_sz
    keys = iter(jax.random.split(key, 128))

    def nrm(shape, scale=0.02):
        return jax.random.normal(next(keys), shape, jnp.float32) * scale

    p = {
        "word_emb": nrm((cfg.vocab_size, H)),
        "pos_emb": nrm((cfg.max_position, H)),
        "type_emb": nrm((cfg.type_vocab, H)),
        "emb_ln_g": jnp.ones((H,), jnp.float32),
        "emb_ln_b": jnp.zeros((H,), jnp.float32),
        # image trunk: conv weight stored im2col-flattened as (kh*kw*Cin, Cout).
        "conv_w": nrm((3 * 3 * cfg.img_ch, cfg.img_hidden_sz)),
        "conv_b": jnp.zeros((cfg.img_hidden_sz,), jnp.float32),
        # ImageBertEmbeddings.img_embeddings stored as (in, out): x @ W + b.
        "img_proj_w": nrm((cfg.img_hidden_sz, H)),
        "img_proj_b": jnp.zeros((H,), jnp.float32),
        "pool_w": nrm((H, H)),
        "pool_b": jnp.zeros((H,), jnp.float32),
    }
    layers = []
    for _ in range(cfg.n_layers):
        layers.append({
            "wq": nrm((H, H)), "bq": jnp.zeros((H,), jnp.float32),
            "wk": nrm((H, H)), "bk": jnp.zeros((H,), jnp.float32),
            "wv": nrm((H, H)), "bv": jnp.zeros((H,), jnp.float32),
            "wo": nrm((H, H)), "bo": jnp.zeros((H,), jnp.float32),
            "ln1_g": jnp.ones((H,), jnp.float32),
            "ln1_b": jnp.zeros((H,), jnp.float32),
            "wi": nrm((H, I)), "bi": jnp.zeros((I,), jnp.float32),
            "wo2": nrm((I, H)), "bo2": jnp.zeros((H,), jnp.float32),
            "ln2_g": jnp.ones((H,), jnp.float32),
            "ln2_b": jnp.zeros((H,), jnp.float32),
        })
    p["layers"] = layers
    return p


def prepare_params(params, cfg):
    """One-time host-side prep: bf16 weights, head-major QKV / out-proj, and
    per-layer weights stacked along a leading layer axis for the fused
    encoder-stack kernel (next layer's weights prefetch under compute)."""
    H, I = cfg.hidden_sz, cfg.intermediate_sz
    nh = cfg.n_heads
    hd = H // nh

    def hm(w):                       # (H, H) -> (nh, H, hd): columns by head
        return w.reshape(H, nh, hd).transpose(1, 0, 2)

    def hb(b):                       # (H,) -> (nh, 1, hd)
        return b.reshape(nh, 1, hd)

    wqkv, bqkv, wo, bo = [], [], [], []
    ln1g, ln1b, wi, bi, wo2, bo2, ln2g, ln2b = [], [], [], [], [], [], [], []
    for lyr in params["layers"]:
        wqkv.append(jnp.concatenate(
            [hm(lyr["wq"]), hm(lyr["wk"]), hm(lyr["wv"])], axis=-1))
        bqkv.append(jnp.concatenate(
            [hb(lyr["bq"]), hb(lyr["bk"]), hb(lyr["bv"])], axis=-1))
        wo.append(lyr["wo"].reshape(nh, hd, H))        # rows grouped by head
        bo.append(lyr["bo"].reshape(1, H))
        ln1g.append(lyr["ln1_g"].reshape(1, H))
        ln1b.append(lyr["ln1_b"].reshape(1, H))
        wi.append(lyr["wi"])
        bi.append(lyr["bi"].reshape(1, I))
        wo2.append(lyr["wo2"])
        bo2.append(lyr["bo2"].reshape(1, H))
        ln2g.append(lyr["ln2_g"].reshape(1, H))
        ln2b.append(lyr["ln2_b"].reshape(1, H))

    enc = {
        "w_qkv": _bf16(jnp.stack(wqkv)),    # (L, nh, H, 3*hd)
        "b_qkv": jnp.stack(bqkv),           # (L, nh, 1, 3*hd)
        "wo": _bf16(jnp.stack(wo)),         # (L, nh, hd, H)
        "bo": jnp.stack(bo),                # (L, 1, H)
        "ln1_g": jnp.stack(ln1g), "ln1_b": jnp.stack(ln1b),
        "wi": _bf16(jnp.stack(wi)),         # (L, H, I)
        "bi": jnp.stack(bi),                # (L, 1, I)
        "wo2": _bf16(jnp.stack(wo2)),       # (L, I, H)
        "bo2": jnp.stack(bo2),
        "ln2_g": jnp.stack(ln2g), "ln2_b": jnp.stack(ln2b),
    }
    return {
        "word_emb": params["word_emb"],
        "pos_emb": params["pos_emb"],
        "type_emb": params["type_emb"],
        "emb_ln_g": params["emb_ln_g"],
        "emb_ln_b": params["emb_ln_b"],
        "conv_w": _bf16(params["conv_w"]),
        "conv_b": params["conv_b"].reshape(1, -1),
        "img_proj_w": _bf16(params["img_proj_w"]),
        "img_proj_b": params["img_proj_b"].reshape(1, -1),
        "pool_w": _bf16(params["pool_w"]),
        "pool_b": params["pool_b"].reshape(1, -1),
        "encoder": enc,
    }


# -------------------------------- forward ----------------------------------

def multimodal_bert_encoder(params, cfg, input_txt, attention_mask, segment,
                            input_img):
    B = input_txt.shape[0]
    nh = cfg.n_heads
    n_img = cfg.num_image_embeds
    img_seq = n_img + 2
    S_txt = input_txt.shape[1]
    S = img_seq + S_txt

    # ---- extended attention mask (image tokens always attended) ----
    full_mask = jnp.concatenate(
        [jnp.ones((B, img_seq), jnp.float32),
         attention_mask.astype(jnp.float32)], axis=1)
    ext_mask = ((1.0 - full_mask) * -10000.0).reshape(B, 1, S)

    # ---- ImageEncoder ----
    # TODO(synk): torchvision resnet152 pretrained trunk replaced by one
    # synthetic 3x3/stride-2 conv stem (im2col + fused Pallas kernel) since
    # pretrained weights cannot be loaded in-script; pool/flatten/transpose
    # semantics preserved.
    x = jnp.transpose(input_img.astype(jnp.float32), (0, 2, 3, 1))  # NCHW->NHWC
    _, Hh, Ww, Cin = x.shape
    OH, OW = Hh // 2, Ww // 2
    xp = jnp.pad(x, ((0, 0), (1, 1), (1, 1), (0, 0)))
    cols = []
    for dh in range(3):
        for dw in range(3):
            cols.append(xp[:, dh:dh + 2 * OH:2, dw:dw + 2 * OW:2, :])
    # TODO(synk): at resnet scale keep the padded image in HBM and accumulate
    # the 9 taps + adaptive-pool partial sums inside the kernel over row tiles
    # instead of materializing the full im2col slab.
    patches = jnp.concatenate(cols, axis=-1).reshape(B, OH * OW, 9 * Cin)

    # AdaptiveAvgPool2d((2,2)) as an (n_img, OH*OW) averaging matmul, fused
    # with the img_embeddings projection inside the image kernel.
    POH, POW = 2, 2
    kh_, kw_ = OH // POH, OW // POW
    cell = (jnp.arange(OH)[:, None] // kh_) * POW + (jnp.arange(OW)[None, :] // kw_)
    pool_mat = _bf16((jnp.arange(n_img)[:, None] == cell.reshape(-1)[None, :]
                      ).astype(jnp.float32) / float(kh_ * kw_))
    img_proj = image_stem(patches, params["conv_w"], params["conv_b"],
                          pool_mat, params["img_proj_w"], params["img_proj_b"])
    # img_proj : (B, n_img, H)

    # ---- token / position / type embeddings for the full (img ++ txt) seq ----
    cls_ids = jnp.full((B, 1), cfg.cls_token_id, jnp.int32)
    sep_ids = jnp.full((B, 1), cfg.sep_token_id, jnp.int32)
    cls_emb = jnp.take(params["word_emb"], cls_ids, axis=0)
    sep_emb = jnp.take(params["word_emb"], sep_ids, axis=0)
    word_txt = jnp.take(params["word_emb"], input_txt.astype(jnp.int32), axis=0)
    tok_emb = jnp.concatenate([cls_emb, img_proj, sep_emb, word_txt], axis=1)

    # Dual BertEmbeddings: image segment positions 0..img_seq-1, text 0..S_txt-1.
    pos = jnp.concatenate([params["pos_emb"][:img_seq],
                           params["pos_emb"][:S_txt]], axis=0)       # (S, H)

    img_tok = jnp.zeros((B, img_seq), jnp.int32)
    typ_ids = jnp.concatenate([img_tok, segment.astype(jnp.int32)], axis=1)
    typ_emb = jnp.take(params["type_emb"], typ_ids, axis=0)          # (B,S,H)

    # LayerNorm is per-token, so one fused call over the concatenated sequence
    # is identical to separate image / text BertEmbeddings LayerNorms.
    hseq = embed_layernorm(tok_emb, pos, typ_emb,
                           params["emb_ln_g"], params["emb_ln_b"])
    # TODO(synk): nn.Dropout omitted (eval / inference semantics -> identity).

    # ---- BERT encoder: one fused pallas_call over all layers ----
    hseq = encoder_stack(hseq, ext_mask, params["encoder"], n_heads=nh)

    # ---- pooler: first token -> Linear -> tanh ----
    return pooler(hseq[:, 0, :], params["pool_w"], params["pool_b"])


# ---------------------------------- main ------------------------------------

if __name__ == "__main__":
    cfg = Cfg()
    key = jax.random.PRNGKey(0)
    pkey, dkey = jax.random.split(key)
    params = prepare_params(init_params(pkey, cfg), cfg)

    k1, k2, k3, k4 = jax.random.split(dkey, 4)
    input_txt = jax.random.randint(k1, (cfg.batch, cfg.txt_seq), 3,
                                   cfg.vocab_size, dtype=jnp.int32)
    attention_mask = jnp.ones((cfg.batch, cfg.txt_seq), jnp.int32)
    segment = jnp.zeros((cfg.batch, cfg.txt_seq), jnp.int32)
    input_img = jax.random.normal(
        k4, (cfg.batch, cfg.img_ch, cfg.img_hw, cfg.img_hw), jnp.float32)

    out = multimodal_bert_encoder(params, cfg, input_txt, attention_mask,
                                  segment, input_img)
    out = jax.block_until_ready(out)
    assert out.shape == (cfg.batch, cfg.hidden_sz)
    assert bool(jnp.all(jnp.isfinite(out)))
    print("KERNEL_OK")
</pallas_src>

<mosaic_0001>
module attributes {stable_mosaic.version = 11 : i64} {
  func.func @_image_stem_kernel(%arg0: memref<2x64x36xf32, #tpu.memory_space<vmem>>, %arg1: memref<36x16xbf16, #tpu.memory_space<vmem>>, %arg2: memref<1x16xf32, #tpu.memory_space<vmem>>, %arg3: memref<4x64xbf16, #tpu.memory_space<vmem>>, %arg4: memref<16x32xbf16, #tpu.memory_space<vmem>>, %arg5: memref<1x32xf32, #tpu.memory_space<vmem>>, %arg6: memref<2x4x32xf32, #tpu.memory_space<vmem>>) attributes {dimension_semantics = [], scalar_prefetch = 0 : i64, scratch_operands = 0 : i64, tpu.core_type = #tpu.core_type<tc>} {
    %c0 = arith.constant 0 : index
    %c0_0 = arith.constant 0 : index
    %c0_1 = arith.constant 0 : index
    %0 = vector.load %arg0[%c0, %c0_0, %c0_1] : memref<2x64x36xf32, #tpu.memory_space<vmem>>, vector<1x64x36xf32>
    %1 = vector.shape_cast %0 : vector<1x64x36xf32> to vector<64x36xf32>
    %2 = arith.truncf %1 : vector<64x36xf32> to vector<64x36xbf16>
    %c0_2 = arith.constant 0 : index
    %c0_3 = arith.constant 0 : index
    %3 = vector.load %arg1[%c0_2, %c0_3] : memref<36x16xbf16, #tpu.memory_space<vmem>>, vector<36x16xbf16>
    %cst = arith.constant dense<0.000000e+00> : vector<64x16xf32>
    %4 = tpu.matmul %2, %3, %cst {dimension_numbers = #tpu.dot_dimension_numbers<[1], [0], [0], [1], [0, 0, 1, 1], [], []>} : vector<64x36xbf16>, vector<36x16xbf16>, vector<64x16xf32> -> vector<64x16xf32>
    %c0_4 = arith.constant 0 : index
    %c0_5 = arith.constant 0 : index
    %5 = vector.load %arg2[%c0_4, %c0_5] : memref<1x16xf32, #tpu.memory_space<vmem>>, vector<1x16xf32>
    %6 = vector.broadcast %5 : vector<1x16xf32> to vector<64x16xf32>
    %7 = arith.addf %4, %6 : vector<64x16xf32>
    %cst_6 = arith.constant 0.000000e+00 : f32
    %8 = vector.broadcast %cst_6 : f32 to vector<64x16xf32>
    %9 = arith.maximumf %7, %8 : vector<64x16xf32>
    %c0_7 = arith.constant 0 : index
    %c0_8 = arith.constant 0 : index
    %10 = vector.load %arg3[%c0_7, %c0_8] : memref<4x64xbf16, #tpu.memory_space<vmem>>, vector<4x64xbf16>
    %11 = arith.truncf %9 : vector<64x16xf32> to vector<64x16xbf16>
    %cst_9 = arith.constant dense<0.000000e+00> : vector<4x16xf32>
    %12 = tpu.matmul %10, %11, %cst_9 {dimension_numbers = #tpu.dot_dimension_numbers<[1], [0], [0], [1], [0, 0, 1, 1], [], []>} : vector<4x64xbf16>, vector<64x16xbf16>, vector<4x16xf32> -> vector<4x16xf32>
    %13 = arith.truncf %12 : vector<4x16xf32> to vector<4x16xbf16>
    %c0_10 = arith.constant 0 : index
    %c0_11 = arith.constant 0 : index
    %14 = vector.load %arg4[%c0_10, %c0_11] : memref<16x32xbf16, #tpu.memory_space<vmem>>, vector<16x32xbf16>
    %cst_12 = arith.constant dense<0.000000e+00> : vector<4x32xf32>
    %15 = tpu.matmul %13, %14, %cst_12 {dimension_numbers = #tpu.dot_dimension_numbers<[1], [0], [0], [1], [0, 0, 1, 1], [], []>} : vector<4x16xbf16>, vector<16x32xbf16>, vector<4x32xf32> -> vector<4x32xf32>
    %c0_13 = arith.constant 0 : index
    %c0_14 = arith.constant 0 : index
    %16 = vector.load %arg5[%c0_13, %c0_14] : memref<1x32xf32, #tpu.memory_space<vmem>>, vector<1x32xf32>
    %17 = vector.broadcast %16 : vector<1x32xf32> to vector<4x32xf32>
    %18 = arith.addf %15, %17 : vector<4x32xf32>
    %c0_15 = arith.constant 0 : index
    %c0_16 = arith.constant 0 : index
    %c0_17 = arith.constant 0 : index
    %19 = vector.load %arg6[%c0_15, %c0_16, %c0_17] : memref<2x4x32xf32, #tpu.memory_space<vmem>>, vector<1x4x32xf32>
    %20 = vector.shape_cast %19 : vector<1x4x32xf32> to vector<4x32xf32>
    %21 = vector.shape_cast %18 : vector<4x32xf32> to vector<1x4x32xf32>
    tpu.vector_store %arg6[%c0_15, %c0_16, %c0_17], %21 {strides = array<i32>} : memref<2x4x32xf32, #tpu.memory_space<vmem>>, vector<1x4x32xf32>,
    %c1 = arith.constant 1 : index
    %c0_18 = arith.constant 0 : index
    %c0_19 = arith.constant 0 : index
    %22 = vector.load %arg0[%c1, %c0_18, %c0_19] : memref<2x64x36xf32, #tpu.memory_space<vmem>>, vector<1x64x36xf32>
    %23 = vector.shape_cast %22 : vector<1x64x36xf32> to vector<64x36xf32>
    %24 = arith.truncf %23 : vector<64x36xf32> to vector<64x36xbf16>
    %c0_20 = arith.constant 0 : index
    %c0_21 = arith.constant 0 : index
    %25 = vector.load %arg1[%c0_20, %c0_21] : memref<36x16xbf16, #tpu.memory_space<vmem>>, vector<36x16xbf16>
    %cst_22 = arith.constant dense<0.000000e+00> : vector<64x16xf32>
    %26 = tpu.matmul %24, %25, %cst_22 {dimension_numbers = #tpu.dot_dimension_numbers<[1], [0], [0], [1], [0, 0, 1, 1], [], []>} : vector<64x36xbf16>, vector<36x16xbf16>, vector<64x16xf32> -> vector<64x16xf32>
    %c0_23 = arith.constant 0 : index
    %c0_24 = arith.constant 0 : index
    %27 = vector.load %arg2[%c0_23, %c0_24] : memref<1x16xf32, #tpu.memory_space<vmem>>, vector<1x16xf32>
    %28 = vector.broadcast %27 : vector<1x16xf32> to vector<64x16xf32>
    %29 = arith.addf %26, %28 : vector<64x16xf32>
    %cst_25 = arith.constant 0.000000e+00 : f32
    %30 = vector.broadcast %cst_25 : f32 to vector<64x16xf32>
    %31 = arith.maximumf %29, %30 : vector<64x16xf32>
    %c0_26 = arith.constant 0 : index
    %c0_27 = arith.constant 0 : index
    %32 = vector.load %arg3[%c0_26, %c0_27] : memref<4x64xbf16, #tpu.memory_space<vmem>>, vector<4x64xbf16>
    %33 = arith.truncf %31 : vector<64x16xf32> to vector<64x16xbf16>
    %cst_28 = arith.constant dense<0.000000e+00> : vector<4x16xf32>
    %34 = tpu.matmul %32, %33, %cst_28 {dimension_numbers = #tpu.dot_dimension_numbers<[1], [0], [0], [1], [0, 0, 1, 1], [], []>} : vector<4x64xbf16>, vector<64x16xbf16>, vector<4x16xf32> -> vector<4x16xf32>
    %35 = arith.truncf %34 : vector<4x16xf32> to vector<4x16xbf16>
    %c0_29 = arith.constant 0 : index
    %c0_30 = arith.constant 0 : index
    %36 = vector.load %arg4[%c0_29, %c0_30] : memref<16x32xbf16, #tpu.memory_space<vmem>>, vector<16x32xbf16>
    %cst_31 = arith.constant dense<0.000000e+00> : vector<4x32xf32>
    %37 = tpu.matmul %35, %36, %cst_31 {dimension_numbers = #tpu.dot_dimension_numbers<[1], [0], [0], [1], [0, 0, 1, 1], [], []>} : vector<4x16xbf16>, vector<16x32xbf16>, vector<4x32xf32> -> vector<4x32xf32>
    %c0_32 = arith.constant 0 : index
    %c0_33 = arith.constant 0 : index
    %38 = vector.load %arg5[%c0_32, %c0_33] : memref<1x32xf32, #tpu.memory_space<vmem>>, vector<1x32xf32>
    %39 = vector.broadcast %38 : vector<1x32xf32> to vector<4x32xf32>
    %40 = arith.addf %37, %39 : vector<4x32xf32>
    %c1_34 = arith.constant 1 : index
    %c0_35 = arith.constant 0 : index
    %c0_36 = arith.constant 0 : index
    %41 = vector.load %arg6[%c1_34, %c0_35, %c0_36] : memref<2x4x32xf32, #tpu.memory_space<vmem>>, vector<1x4x32xf32>
    %42 = vector.shape_cast %41 : vector<1x4x32xf32> to vector<4x32xf32>
    %43 = vector.shape_cast %40 : vector<4x32xf32> to vector<1x4x32xf32>
    tpu.vector_store %arg6[%c1_34, %c0_35, %c0_36], %43 {strides = array<i32>} : memref<2x4x32xf32, #tpu.memory_space<vmem>>, vector<1x4x32xf32>,
    return
  }
}

</mosaic_0001>

<llo_original>
// kernel: tpu_custom_call.1
$region0: #{tpu_custom_call.1}
  #allocation0 [shape = 'u32[]', space=smem, size = 0x4, offset = 0x4, fixed_abs, tag = 'smem constant byte address 0x4 - core index']
  #allocation1 [shape = 'u32[144,128]{1,0:T(1,128)}', space=vmem, size = 0x12000, scoped, tag = 'internal scratch']
  %s0 = inlined_call_operand.vmem [shape: f32[2,64,36], index: 0, kind: input, shape index: {}]
  %s1 = inlined_call_operand.vmem [shape: bf16[36,16], index: 1, kind: input, shape index: {}]
  %s2 = inlined_call_operand.vmem [shape: f32[1,16], index: 2, kind: input, shape index: {}]
  %s3 = inlined_call_operand.vmem [shape: bf16[4,64], index: 3, kind: input, shape index: {}]
  %s4 = inlined_call_operand.vmem [shape: bf16[16,32], index: 4, kind: input, shape index: {}]
  %s5 = inlined_call_operand.vmem [shape: f32[1,32], index: 5, kind: input, shape index: {}]
  %s6 = inlined_call_operand.hbm [shape: f32[2,4,32], index: 6, kind: output, shape index: {}]
  %s7 = sld [smem:[#allocation0]]
  $region34: #{tpu_custom_call.1} parent=0
    _
  %s9 = ssub.s32 1, %s7
  %s10 = scalar_select 0, %s9, %s7
  $region1: #{tpu_custom_call.1} parent=0
    #allocation2 [shape = 'u8[4096]{0}', space=vmem, size = 0x1000, scoped, tag = 'output window, operand 0, single buffered']
    #allocation3 [shape = 's32[1]{0}', space=sflag, size = 0x4, scoped, tag = 'scoped memory for tpu_custom_call.1']
    %11 = vsyncpa [#allocation3], 0
    // Predicated region
    $region2: #{tpu_custom_call.1} parent=1 // pred_check
      _
    $region3: #{tpu_custom_call.1} parent=1 // pred_check_branch
      %13 = sbr.rel (0) target = $region5
    $region4: #{tpu_custom_call.1} parent=1 // pred_region
      _
    $region5: #{tpu_custom_call.1} parent=1 // pred_fallthru
      _
    // Predicated region
    $region6: #{tpu_custom_call.1} parent=1 // pred_check
      _
    $region7: #{tpu_custom_call.1} parent=1 // pred_check_branch
      %15 = sbr.rel (0) target = $region9
    $region8: #{tpu_custom_call.1} parent=1 // pred_region
      _
    $region9: #{tpu_custom_call.1} parent=1 // pred_fallthru
      _
    // Predicated region
    $region10: #{tpu_custom_call.1} parent=1 // pred_check
      _
    $region11: #{tpu_custom_call.1} parent=1 // pred_check_branch
      %17 = sbr.rel (0) target = $region13
    $region12: #{tpu_custom_call.1} parent=1 // pred_region
      _
    $region13: #{tpu_custom_call.1} parent=1 // pred_fallthru
      _
    // Predicated region
    $region14: #{tpu_custom_call.1} parent=1 // pred_check
      _
    $region15: #{tpu_custom_call.1} parent=1 // pred_check_branch
      %19 = sbr.rel (0) target = $region17
    $region16: #{tpu_custom_call.1} parent=1 // pred_region
      _
    $region17: #{tpu_custom_call.1} parent=1 // pred_fallthru
      _
    // Predicated region
    $region18: #{tpu_custom_call.1} parent=1 // pred_check
      _
    $region19: #{tpu_custom_call.1} parent=1 // pred_check_branch
      %21 = sbr.rel (0) target = $region21
    $region20: #{tpu_custom_call.1} parent=1 // pred_region
      _
    $region21: #{tpu_custom_call.1} parent=1 // pred_fallthru
      _
    // Predicated region
    $region22: #{tpu_custom_call.1} parent=1 // pred_check
      _
    $region23: #{tpu_custom_call.1} parent=1 // pred_check_branch
      %23 = sbr.rel (0) target = $region25
    $region24: #{tpu_custom_call.1} parent=1 // pred_region
      _
    $region25: #{tpu_custom_call.1} parent=1 // pred_fallthru
      _
    %v25 = vld [vmem:[%s0] sm:$0xff]
    %v26 = vld [vmem:[%s0 + $0x8] sm:$0xff]
    %v27 = vld [vmem:[%s0 + $0x10] sm:$0xff]
    %v28 = vld [vmem:[%s0 + $0x18] sm:$0xff]
    %v29 = vld [vmem:[%s0 + $0x20] sm:$0xff]
    %v30 = vld [vmem:[%s0 + $0x28] sm:$0xff]
    %v31 = vld [vmem:[%s0 + $0x30] sm:$0xff]
    %v32 = vld [vmem:[%s0 + $0x38] sm:$0xff]
    %v33 = vpack.c.bf16 %v26, %v25
    %v34 = vpack.c.bf16 %v28, %v27
    %v35 = vpack.c.bf16 %v30, %v29
    %v36 = vpack.c.bf16 %v32, %v31
    %v37 = vld [vmem:[%s1] sm:$0xf]
    %v38 = vld [vmem:[%s1 + $0x4] sm:$0xf]
    %v39 = vld [vmem:[%s1 + $0x8] sm:$0xf]
    %v40 = vld [vmem:[%s1 + $0xc] sm:$0xf]
    %v41 = vld [vmem:[%s1 + $0x10] sm:$0x3]
    %v42 = vld [vmem:[%s2] sm:$0x1]
    %v44 = vlaneseq
    %v45 = vshrl.u32 %v44, 7
    %v46 = vsub.s32 0, %v45
    %v47 = vrot.slane %v42, %v46
    %v54 = vunpack.c.l.b16 %v37
    %v55 = vunpack.c.l.b16 %v38
    %v56 = vunpack.c.l.b16 %v39
    %v57 = vunpack.c.l.b16 %v40
    %v58 = vunpack.c.l.b16 %v41
    %v59 = vpack.c.b16 %v55, %v54
    %v60 = vpack.c.b16 %v57, %v56
    %v61 = vpack.c.b16 %v58, %v58
    %vm64 = vcmask 293888
    %v66 = vsel %vm64, %v33, 0
    %v69 = vsel %vm64, %v34, 0
    %v72 = vsel %vm64, %v35, 0
    %v75 = vsel %vm64, %v36, 0
    %vm77 = vcmask 1041408
    %v79 = vsel %vm77, %v61, 0
    %81 = vmatprep.subr.bf16.mxu0 0
    %82 = vmatpush1.bf16.msra.mxu0 0
    %83 = vmatprep.subr.bf16.mxu0 0
    %84 = vmatpush1.bf16.msra.mxu0 0
    %85 = vmatprep.subr.bf16.mxu0 0
    %86 = vmatpush1.bf16.msra.mxu0 0
    %87 = vmatprep.subr.bf16.mxu0 0
    %88 = vmatpush1.bf16.msra.mxu0 0
    %89 = vmatprep.subr.bf16.mxu0 0
    %90 = vmatpush1.bf16.msra.mxu0 0
    %91 = vmatprep.subr.bf16.mxu0 0
    %92 = vmatpush1.bf16.msra.mxu0 %v79
    %93 = vmatprep.subr.bf16.mxu0 0
    %94 = vmatpush1.bf16.msra.mxu0 %v60
    %95 = vmatprep.subr.bf16.mxu0 0
    %96 = vmatpush1.bf16.msra.mxu0 %v59
    %97 = vmatprep.subr.bf16.mxu0 0
    %98 = vmatpush2.bf16.msra.mxu0 0
    %99 = vmatprep.subr.bf16.mxu0 0
    %100 = vmatpush2.bf16.msra.mxu0 0
    %101 = vmatprep.subr.bf16.mxu0 0
    %102 = vmatpush2.bf16.msra.mxu0 0
    %103 = vmatprep.subr.bf16.mxu0 0
    %104 = vmatpush2.bf16.msra.mxu0 0
    %105 = vmatprep.subr.bf16.mxu0 0
    %106 = vmatpush2.bf16.msra.mxu0 0
    %107 = vmatprep.subr.bf16.mxu0 0
    %108 = vmatpush2.bf16.msra.mxu0 0
    %109 = vmatprep.subr.bf16.mxu0 0
    %110 = vmatpush2.bf16.msra.mxu0 0
    %111 = vmatprep.subr.bf16.mxu0 0
    %112 = vmatpush2.bf16.msra.mxu0 0
    %113 = vmatprep.mubr.bf16.mxu0 0
    %114 = vmatmul.mubr.bf16.gmra.mxu0 %v66
    %v115 = vpop.f32.mrf.mxu0
    %v116 = vadd.f32 %v47, %v115
    %v117 = vpop.f32.mrf.mxu0
    %v118 = vpop.f32.mrf.mxu0
    %v119 = vadd.f32 %v47, %v118
    %v120 = vpop.f32.mrf.mxu0
    %121 = vmatprep.mubr.bf16.mxu0 0
    %122 = vmatmul.mubr.bf16.gmra.mxu0 %v69
    %v123 = vpop.f32.mrf.mxu0
    %v124 = vadd.f32 %v47, %v123
    %v125 = vpop.f32.mrf.mxu0
    %v126 = vpop.f32.mrf.mxu0
    %v127 = vadd.f32 %v47, %v126
    %v128 = vpop.f32.mrf.mxu0
    %129 = vmatprep.mubr.bf16.mxu0 0
    %130 = vmatmul.mubr.bf16.gmra.mxu0 %v72
    %v131 = vpop.f32.mrf.mxu0
    %v132 = vadd.f32 %v47, %v131
    %v133 = vpop.f32.mrf.mxu0
    %v134 = vpop.f32.mrf.mxu0
    %v135 = vadd.f32 %v47, %v134
    %v136 = vpop.f32.mrf.mxu0
    %137 = vmatprep.mubr.bf16.mxu0 0
    %138 = vmatmul.mubr.bf16.gmra.mxu0 %v75
    %v139 = vpop.f32.mrf.mxu0
    %v140 = vadd.f32 %v47, %v139
    %v141 = vpop.f32.mrf.mxu0
    %v142 = vpop.f32.mrf.mxu0
    %v143 = vadd.f32 %v47, %v142
    %v144 = vpop.f32.mrf.mxu0
    %145 = vdwg.mxu0
    %v146 = vmax.f32 %v116, 0.0
    %v147 = vmax.f32 %v119, 0.0
    %v148 = vmax.f32 %v124, 0.0
    %v149 = vmax.f32 %v127, 0.0
    %v150 = vmax.f32 %v132, 0.0
    %v151 = vmax.f32 %v135, 0.0
    %v152 = vmax.f32 %v140, 0.0
    %v153 = vmax.f32 %v143, 0.0
    %v154 = vld [vmem:[%s3] sm:$0x3]
    %v155 = vpack.c.bf16 %v147, %v146
    %v156 = vpack.c.bf16 %v149, %v148
    %v157 = vpack.c.bf16 %v151, %v150
    %v158 = vpack.c.bf16 %v153, %v152
    %vm159 = vcmask 523264
    %v161 = vsel %vm159, %v154, 0
    %163 = vmatprep.subr.bf16.mxu0 0
    %164 = vmatpush1.bf16.msra.mxu0 0
    %165 = vmatprep.subr.bf16.mxu0 0
    %166 = vmatpush1.bf16.msra.mxu0 0
    %167 = vmatprep.subr.bf16.mxu0 0
    %168 = vmatpush1.bf16.msra.mxu0 0
    %169 = vmatprep.subr.bf16.mxu0 0
    %170 = vmatpush1.bf16.msra.mxu0 0
    %171 = vmatprep.subr.bf16.mxu0 0
    %172 = vmatpush1.bf16.msra.mxu0 %v158
    %173 = vmatprep.subr.bf16.mxu0 0
    %174 = vmatpush1.bf16.msra.mxu0 %v157
    %175 = vmatprep.subr.bf16.mxu0 0
    %176 = vmatpush1.bf16.msra.mxu0 %v156
    %177 = vmatprep.subr.bf16.mxu0 0
    %178 = vmatpush1.bf16.msra.mxu0 %v155
    %179 = vmatprep.subr.bf16.mxu0 0
    %180 = vmatpush2.bf16.msra.mxu0 0
    %181 = vmatprep.subr.bf16.mxu0 0
    %182 = vmatpush2.bf16.msra.mxu0 0
    %183 = vmatprep.subr.bf16.mxu0 0
    %184 = vmatpush2.bf16.msra.mxu0 0
    %185 = vmatprep.subr.bf16.mxu0 0
    %186 = vmatpush2.bf16.msra.mxu0 0
    %187 = vmatprep.subr.bf16.mxu0 0
    %188 = vmatpush2.bf16.msra.mxu0 0
    %189 = vmatprep.subr.bf16.mxu0 0
    %190 = vmatpush2.bf16.msra.mxu0 0
    %191 = vmatprep.subr.bf16.mxu0 0
    %192 = vmatpush2.bf16.msra.mxu0 0
    %193 = vmatprep.subr.bf16.mxu0 0
    %194 = vmatpush2.bf16.msra.mxu0 0
    %195 = vmatprep.mubr.bf16.mxu0 0
    %196 = vmatmul.mubr.bf16.gmra.mxu0 %v161
    %v197 = vpop.f32.mrf.mxu0
    %v198 = vadd.f32 0.0, %v197
    %v199 = vpop.f32.mrf.mxu0
    %v200 = vpop.f32.mrf.mxu0
    %v201 = vpop.f32.mrf.mxu0
    %202 = vdwg.mxu0
    %v203 = vpack.c.bf16 %v198, %v198
    %v204 = vld [vmem:[%s4] sm:$0xf]
    %v205 = vld [vmem:[%s4 + $0x4] sm:$0xf]
    %v206 = vld [vmem:[%s5] sm:$0x1]
    %v208 = vlaneseq
    %v209 = vshrl.u32 %v208, 7
    %v210 = vsub.s32 0, %v209
    %v211 = vrot.slane %v206, %v210
    %v215 = vunpack.c.l.b16 %v204
    %v216 = vunpack.c.l.b16 %v205
    %v217 = vpack.c.b16 %v216, %v215
    %vm219 = vcmask 130048
    %v221 = vsel %vm219, %v203, 0
    %223 = vmatprep.subr.bf16.mxu0 0
    %224 = vmatpush1.bf16.msra.mxu0 0
    %225 = vmatprep.subr.bf16.mxu0 0
    %226 = vmatpush1.bf16.msra.mxu0 0
    %227 = vmatprep.subr.bf16.mxu0 0
    %228 = vmatpush1.bf16.msra.mxu0 0
    %229 = vmatprep.subr.bf16.mxu0 0
    %230 = vmatpush1.bf16.msra.mxu0 0
    %231 = vmatprep.subr.bf16.mxu0 0
    %232 = vmatpush1.bf16.msra.mxu0 0
    %233 = vmatprep.subr.bf16.mxu0 0
    %234 = vmatpush1.bf16.msra.mxu0 0
    %235 = vmatprep.subr.bf16.mxu0 0
    %236 = vmatpush1.bf16.msra.mxu0 0
    %237 = vmatprep.subr.bf16.mxu0 0
    %238 = vmatpush1.bf16.msra.mxu0 %v217
    %239 = vmatprep.subr.bf16.mxu0 0
    %240 = vmatpush2.bf16.msra.mxu0 0
    %241 = vmatprep.subr.bf16.mxu0 0
    %242 = vmatpush2.bf16.msra.mxu0 0
    %243 = vmatprep.subr.bf16.mxu0 0
    %244 = vmatpush2.bf16.msra.mxu0 0
    %245 = vmatprep.subr.bf16.mxu0 0
    %246 = vmatpush2.bf16.msra.mxu0 0
    %247 = vmatprep.subr.bf16.mxu0 0
    %248 = vmatpush2.bf16.msra.mxu0 0
    %249 = vmatprep.subr.bf16.mxu0 0
    %250 = vmatpush2.bf16.msra.mxu0 0
    %251 = vmatprep.subr.bf16.mxu0 0
    %252 = vmatpush2.bf16.msra.mxu0 0
    %253 = vmatprep.subr.bf16.mxu0 0
    %254 = vmatpush2.bf16.msra.mxu0 0
    %255 = vmatprep.mubr.bf16.mxu0 0
    %256 = vmatmul.mubr.bf16.gmra.mxu0 %v221
    %v257 = vpop.f32.mrf.mxu0
    %v258 = vadd.f32 %v211, %v257
    %v259 = vpop.f32.mrf.mxu0
    %v260 = vpop.f32.mrf.mxu0
    %v261 = vpop.f32.mrf.mxu0
    %262 = vdwg.mxu0
    %vm263 = vcmask 257024
    %264 = vst.msk [vmem:[#allocation2] sm:$0xf] %vm263, %v258
    %s265 = scalar_lea.vmem %s0, 64
    %v266 = vld [vmem:[%s265] sm:$0xff]
    %v267 = vld [vmem:[%s265 + $0x8] sm:$0xff]
    %v268 = vld [vmem:[%s265 + $0x10] sm:$0xff]
    %v269 = vld [vmem:[%s265 + $0x18] sm:$0xff]
    %v270 = vld [vmem:[%s265 + $0x20] sm:$0xff]
    %v271 = vld [vmem:[%s265 + $0x28] sm:$0xff]
    %v272 = vld [vmem:[%s265 + $0x30] sm:$0xff]
    %v273 = vld [vmem:[%s265 + $0x38] sm:$0xff]
    %v274 = vpack.c.bf16 %v267, %v266
    %v275 = vpack.c.bf16 %v269, %v268
    %v276 = vpack.c.bf16 %v271, %v270
    %v277 = vpack.c.bf16 %v273, %v272
    %v278 = vld [vmem:[%s1] sm:$0xf]
    %v279 = vld [vmem:[%s1 + $0x4] sm:$0xf]
    %v280 = vld [vmem:[%s1 + $0x8] sm:$0xf]
    %v281 = vld [vmem:[%s1 + $0xc] sm:$0xf]
    %v282 = vld [vmem:[%s1 + $0x10] sm:$0x3]
    %v283 = vld [vmem:[%s2] sm:$0x1]
    %v285 = vlaneseq
    %v286 = vshrl.u32 %v285, 7
    %v287 = vsub.s32 0, %v286
    %v288 = vrot.slane %v283, %v287
    %v295 = vunpack.c.l.b16 %v278
    %v296 = vunpack.c.l.b16 %v279
    %v297 = vunpack.c.l.b16 %v280
    %v298 = vunpack.c.l.b16 %v281
    %v299 = vunpack.c.l.b16 %v282
    %v300 = vpack.c.b16 %v296, %v295
    %v301 = vpack.c.b16 %v298, %v297
    %v302 = vpack.c.b16 %v299, %v299
    %v306 = vsel %vm64, %v274, 0
    %v309 = vsel %vm64, %v275, 0
    %v312 = vsel %vm64, %v276, 0
    %v315 = vsel %vm64, %v277, 0
    %v318 = vsel %vm77, %v302, 0
    %320 = vmatprep.subr.bf16.mxu0 0
    %321 = vmatpush1.bf16.msra.mxu0 0
    %322 = vmatprep.subr.bf16.mxu0 0
    %323 = vmatpush1.bf16.msra.mxu0 0
    %324 = vmatprep.subr.bf16.mxu0 0
    %325 = vmatpush1.bf16.msra.mxu0 0
    %326 = vmatprep.subr.bf16.mxu0 0
    %327 = vmatpush1.bf16.msra.mxu0 0
    %328 = vmatprep.subr.bf16.mxu0 0
    %329 = vmatpush1.bf16.msra.mxu0 0
    %330 = vmatprep.subr.bf16.mxu0 0
    %331 = vmatpush1.bf16.msra.mxu0 %v318
    %332 = vmatprep.subr.bf16.mxu0 0
    %333 = vmatpush1.bf16.msra.mxu0 %v301
    %334 = vmatprep.subr.bf16.mxu0 0
    %335 = vmatpush1.bf16.msra.mxu0 %v300
    %336 = vmatprep.subr.bf16.mxu0 0
    %337 = vmatpush2.bf16.msra.mxu0 0
    %338 = vmatprep.subr.bf16.mxu0 0
    %339 = vmatpush2.bf16.msra.mxu0 0
    %340 = vmatprep.subr.bf16.mxu0 0
    %341 = vmatpush2.bf16.msra.mxu0 0
    %342 = vmatprep.subr.bf16.mxu0 0
    %343 = vmatpush2.bf16.msra.mxu0 0
    %344 = vmatprep.subr.bf16.mxu0 0
    %345 = vmatpush2.bf16.msra.mxu0 0
    %346 = vmatprep.subr.bf16.mxu0 0
    %347 = vmatpush2.bf16.msra.mxu0 0
    %348 = vmatprep.subr.bf16.mxu0 0
    %349 = vmatpush2.bf16.msra.mxu0 0
    %350 = vmatprep.subr.bf16.mxu0 0
    %351 = vmatpush2.bf16.msra.mxu0 0
    %352 = vmatprep.mubr.bf16.mxu0 0
    %353 = vmatmul.mubr.bf16.gmra.mxu0 %v306
    %v354 = vpop.f32.mrf.mxu0
    %v355 = vadd.f32 %v288, %v354
    %v356 = vpop.f32.mrf.mxu0
    %v357 = vpop.f32.mrf.mxu0
    %v358 = vadd.f32 %v288, %v357
    %v359 = vpop.f32.mrf.mxu0
    %360 = vmatprep.mubr.bf16.mxu0 0
    %361 = vmatmul.mubr.bf16.gmra.mxu0 %v309
    %v362 = vpop.f32.mrf.mxu0
    %v363 = vadd.f32 %v288, %v362
    %v364 = vpop.f32.mrf.mxu0
    %v365 = vpop.f32.mrf.mxu0
    %v366 = vadd.f32 %v288, %v365
    %v367 = vpop.f32.mrf.mxu0
    %368 = vmatprep.mubr.bf16.mxu0 0
    %369 = vmatmul.mubr.bf16.gmra.mxu0 %v312
    %v370 = vpop.f32.mrf.mxu0
    %v371 = vadd.f32 %v288, %v370
    %v372 = vpop.f32.mrf.mxu0
    %v373 = vpop.f32.mrf.mxu0
    %v374 = vadd.f32 %v288, %v373
    %v375 = vpop.f32.mrf.mxu0
    %376 = vmatprep.mubr.bf16.mxu0 0
    %377 = vmatmul.mubr.bf16.gmra.mxu0 %v315
    %v378 = vpop.f32.mrf.mxu0
    %v379 = vadd.f32 %v288, %v378
    %v380 = vpop.f32.mrf.mxu0
    %v381 = vpop.f32.mrf.mxu0
    %v382 = vadd.f32 %v288, %v381
    %v383 = vpop.f32.mrf.mxu0
    %384 = vdwg.mxu0
    %v385 = vmax.f32 %v355, 0.0
    %v386 = vmax.f32 %v358, 0.0
    %v387 = vmax.f32 %v363, 0.0
    %v388 = vmax.f32 %v366, 0.0
    %v389 = vmax.f32 %v371, 0.0
    %v390 = vmax.f32 %v374, 0.0
    %v391 = vmax.f32 %v379, 0.0
    %v392 = vmax.f32 %v382, 0.0
    %v393 = vld [vmem:[%s3] sm:$0x3]
    %v394 = vpack.c.bf16 %v386, %v385
    %v395 = vpack.c.bf16 %v388, %v387
    %v396 = vpack.c.bf16 %v390, %v389
    %v397 = vpack.c.bf16 %v392, %v391
    %v399 = vsel %vm159, %v393, 0
    %401 = vmatprep.subr.bf16.mxu0 0
    %402 = vmatpush1.bf16.msra.mxu0 0
    %403 = vmatprep.subr.bf16.mxu0 0
    %404 = vmatpush1.bf16.msra.mxu0 0
    %405 = vmatprep.subr.bf16.mxu0 0
    %406 = vmatpush1.bf16.msra.mxu0 0
    %407 = vmatprep.subr.bf16.mxu0 0
    %408 = vmatpush1.bf16.msra.mxu0 0
    %409 = vmatprep.subr.bf16.mxu0 0
    %410 = vmatpush1.bf16.msra.mxu0 %v397
    %411 = vmatprep.subr.bf16.mxu0 0
    %412 = vmatpush1.bf16.msra.mxu0 %v396
    %413 = vmatprep.subr.bf16.mxu0 0
    %414 = vmatpush1.bf16.msra.mxu0 %v395
    %415 = vmatprep.subr.bf16.mxu0 0
    %416 = vmatpush1.bf16.msra.mxu0 %v394
    %417 = vmatprep.subr.bf16.mxu0 0
    %418 = vmatpush2.bf16.msra.mxu0 0
    %419 = vmatprep.subr.bf16.mxu0 0
    %420 = vmatpush2.bf16.msra.mxu0 0
    %421 = vmatprep.subr.bf16.mxu0 0
    %422 = vmatpush2.bf16.msra.mxu0 0
    %423 = vmatprep.subr.bf16.mxu0 0
    %424 = vmatpush2.bf16.msra.mxu0 0
    %425 = vmatprep.subr.bf16.mxu0 0
    %426 = vmatpush2.bf16.msra.mxu0 0
    %427 = vmatprep.subr.bf16.mxu0 0
    %428 = vmatpush2.bf16.msra.mxu0 0
    %429 = vmatprep.subr.bf16.mxu0 0
    %430 = vmatpush2.bf16.msra.mxu0 0
    %431 = vmatprep.subr.bf16.mxu0 0
    %432 = vmatpush2.bf16.msra.mxu0 0
    %433 = vmatprep.mubr.bf16.mxu0 0
    %434 = vmatmul.mubr.bf16.gmra.mxu0 %v399
    %v435 = vpop.f32.mrf.mxu0
    %v436 = vadd.f32 0.0, %v435
    %v437 = vpop.f32.mrf.mxu0
    %v438 = vpop.f32.mrf.mxu0
    %v439 = vpop.f32.mrf.mxu0
    %440 = vdwg.mxu0
    %v441 = vpack.c.bf16 %v436, %v436
    %v442 = vld [vmem:[%s4] sm:$0xf]
    %v443 = vld [vmem:[%s4 + $0x4] sm:$0xf]
    %v444 = vld [vmem:[%s5] sm:$0x1]
    %v446 = vlaneseq
    %v447 = vshrl.u32 %v446, 7
    %v448 = vsub.s32 0, %v447
    %v449 = vrot.slane %v444, %v448
    %v453 = vunpack.c.l.b16 %v442
    %v454 = vunpack.c.l.b16 %v443
    %v455 = vpack.c.b16 %v454, %v453
    %v458 = vsel %vm219, %v441, 0
    %460 = vmatprep.subr.bf16.mxu0 0
    %461 = vmatpush1.bf16.msra.mxu0 0
    %462 = vmatprep.subr.bf16.mxu0 0
    %463 = vmatpush1.bf16.msra.mxu0 0
    %464 = vmatprep.subr.bf16.mxu0 0
    %465 = vmatpush1.bf16.msra.mxu0 0
    %466 = vmatprep.subr.bf16.mxu0 0
    %467 = vmatpush1.bf16.msra.mxu0 0
    %468 = vmatprep.subr.bf16.mxu0 0
    %469 = vmatpush1.bf16.msra.mxu0 0
    %470 = vmatprep.subr.bf16.mxu0 0
    %471 = vmatpush1.bf16.msra.mxu0 0
    %472 = vmatprep.subr.bf16.mxu0 0
    %473 = vmatpush1.bf16.msra.mxu0 0
    %474 = vmatprep.subr.bf16.mxu0 0
    %475 = vmatpush1.bf16.msra.mxu0 %v455
    %476 = vmatprep.subr.bf16.mxu0 0
    %477 = vmatpush2.bf16.msra.mxu0 0
    %478 = vmatprep.subr.bf16.mxu0 0
    %479 = vmatpush2.bf16.msra.mxu0 0
    %480 = vmatprep.subr.bf16.mxu0 0
    %481 = vmatpush2.bf16.msra.mxu0 0
    %482 = vmatprep.subr.bf16.mxu0 0
    %483 = vmatpush2.bf16.msra.mxu0 0
    %484 = vmatprep.subr.bf16.mxu0 0
    %485 = vmatpush2.bf16.msra.mxu0 0
    %486 = vmatprep.subr.bf16.mxu0 0
    %487 = vmatpush2.bf16.msra.mxu0 0
    %488 = vmatprep.subr.bf16.mxu0 0
    %489 = vmatpush2.bf16.msra.mxu0 0
    %490 = vmatprep.subr.bf16.mxu0 0
    %491 = vmatpush2.bf16.msra.mxu0 0
    %492 = vmatprep.mubr.bf16.mxu0 0
    %493 = vmatmul.mubr.bf16.gmra.mxu0 %v458
    %v494 = vpop.f32.mrf.mxu0
    %v495 = vadd.f32 %v449, %v494
    %v496 = vpop.f32.mrf.mxu0
    %v497 = vpop.f32.mrf.mxu0
    %v498 = vpop.f32.mrf.mxu0
    %499 = vdwg.mxu0
    %s500 = scalar_lea.vmem [#allocation2], 4
    %501 = vst.msk [vmem:[%s500] sm:$0xf] %vm263, %v495
    // Predicated region
    $region26: #{tpu_custom_call.1} parent=1 // pred_check
      _
    $region27: #{tpu_custom_call.1} parent=1 // pred_check_branch
      %503 = sbr.rel (0) target = $region29
    $region28: #{tpu_custom_call.1} parent=1 // pred_region
      %s505 = ssub.s32 128, 128
      %506 = vsyncadd [#allocation3], %s505
      %s507 = sshll.u32 [#allocation2], 4
      %s508 = int_to_ptr.vmem [resolvable:$true] %s507
      %513 = dma.vmem_to_hbm [thread:$0]  %s508, 128, %s6, [#allocation3], 64, 64, 4
    $region29: #{tpu_custom_call.1} parent=1 // pred_fallthru
      _
    // Predicated region
    $region30: #{tpu_custom_call.1} parent=1 // pred_check
      _
    $region31: #{tpu_custom_call.1} parent=1 // pred_check_branch
      %515 = sbr.rel (0) target = $region33
    $region32: #{tpu_custom_call.1} parent=1 // pred_region
      %516 = dma.done [#allocation3], 128
    $region33: #{tpu_custom_call.1} parent=1 // pred_fallthru
      _
    %517 = vsyncpa [#allocation3], 1

</llo_original>
